<compile_context>
chip_gen: v7x
topology: tpu7x:2x2x1
jax: 0.10.0
libtpu: 0.0.40
codegen_flags: <defaults>
</compile_context>

<pallas_src>
import functools

import jax
import jax.numpy as jnp
from jax import lax
from jax.experimental import pallas as pl
from jax.experimental.pallas import tpu as pltpu


# ---------------------------------------------------------------------------
# im2col (transposed layout: K on sublanes, P on lanes)
# ---------------------------------------------------------------------------
def _im2col_t(x, k, stride, pad):
    """x: [N, C, H, W] -> patches [C*k*k, N*OH*OW] (C-major, then kh, kw)."""
    N, C, H, W = x.shape
    xp = jnp.pad(x, ((0, 0), (0, 0), (pad, pad), (pad, pad)))
    Hp, Wp = H + 2 * pad, W + 2 * pad
    OH = (Hp - k) // stride + 1
    OW = (Wp - k) // stride + 1
    cols = []
    for di in range(k):
        for dj in range(k):
            cols.append(xp[:, :, di:di + stride * OH:stride,
                           dj:dj + stride * OW:stride])
    p = jnp.stack(cols, axis=2)            # [N, C, k*k, OH, OW]
    p = p.transpose(1, 2, 0, 3, 4)         # [C, k*k, N, OH, OW]
    return p.reshape(C * k * k, N * OH * OW), OH, OW


# ---------------------------------------------------------------------------
# Pass 1: masked partial-conv + new-mask + per-tile BN partial sums
# ---------------------------------------------------------------------------
def _pconv_stats_kernel(imgp_ref, maskp_ref, w_ref,
                        out_ref, nmask_ref, stats_ref, *, cin, scale):
    imgp = imgp_ref[...]                       # [K, Tp],  K = cin*k*k
    msk = maskp_ref[...]                       # [kk, Tp]  (channel-identical)

    # Replicate the k*k mask patch across input channels (K is channel-major).
    mfull = jnp.tile(msk, (cin, 1))            # [K, Tp]
    x = imgp * mfull                           # patches of (img * mask)

    # img_conv(img * mask): [Cout, K] @ [K, Tp] on the MXU (lane-dense output).
    conv = jnp.dot(w_ref[...], x, preferred_element_type=jnp.float32)

    # mask_conv(mask) with all-ones weights == cin * sum over the k*k window.
    msum = jnp.sum(msk, axis=0, keepdims=True) * float(cin)   # [1, Tp]
    hole = msum == 0.0
    mask_sum = jnp.where(hole, 1.0, msum)

    # bias=False in this configuration -> output_bias == 0.
    out = conv * (pl.reciprocal(mask_sum, approx=True) * scale)
    out = jnp.where(hole, 0.0, out)                           # [Cout, Tp]

    out_ref[...] = out
    nmask_ref[...] = jnp.where(hole, 0.0, 1.0)                # [1, Tp]

    # Per-tile, per-channel partials for the *global* BatchNorm statistics.
    s1 = jnp.sum(out, axis=1, keepdims=True)                  # [Cout, 1]
    s2 = jnp.sum(out * out, axis=1, keepdims=True)            # [Cout, 1]
    stats_ref[...] = jnp.concatenate([s1, s2], axis=1)[None]  # [1, Cout, 2]


# ---------------------------------------------------------------------------
# Pass 2: BatchNorm affine (precomputed scale/shift) + ReLU
# ---------------------------------------------------------------------------
def _bn_relu_kernel(x_ref, scale_ref, shift_ref, y_ref):
    y_ref[...] = jnp.maximum(x_ref[...] * scale_ref[...] + shift_ref[...], 0.0)


# ---------------------------------------------------------------------------
# Wrapper
# ---------------------------------------------------------------------------
def _vmem_capacity_bytes():
    try:
        return int(pltpu.get_tpu_info().vmem_capacity_bytes)
    except Exception:
        return 64 * 1024 * 1024       # conservative (v7x-sized) fallback


def _choose_tile_p(P, K, kk, cout, vmem_bytes):
    """Pick a lane-tile over P from the generation's VMEM capacity."""
    # Double-buffered f32 bytes per im2col column across all tiled operands.
    per_col = 2 * 4 * (K + kk + cout + 1)
    budget = vmem_bytes // 8          # headroom for weights / compiler scratch
    tile = max(128, min(budget // per_col, 8192))
    tile = (tile // 128) * 128
    p_pad = ((P + 127) // 128) * 128
    return int(min(tile, p_pad))


def pconv_bn_activ(img, mask, weight, gamma, beta, *,
                   kernel_size, stride, padding):
    N, Cin, H, W = img.shape
    Cout = weight.shape[0]
    k = kernel_size
    kk = k * k

    # TODO(synk): the im2col patches are still materialized in HBM by XLA
    # (~k*k x the image bytes); feeding halo'd NCHW row-slabs straight into the
    # kernel would remove that blowup.
    imgp_t, OH, OW = _im2col_t(img, k, stride, padding)            # [K, P]
    # The inpainting pipeline uses a channel-identical mask; only channel 0 is
    # expanded ([kk, P]) and replicated in-kernel (cuts mask HBM traffic by Cin).
    maskp_t, _, _ = _im2col_t(mask[:, :1], k, stride, padding)     # [kk, P]

    P = N * OH * OW
    K = Cin * kk

    vmem_bytes = _vmem_capacity_bytes()
    tile_p = _choose_tile_p(P, K, kk, Cout, vmem_bytes)
    num_tiles = (P + tile_p - 1) // tile_p
    P_pad = num_tiles * tile_p
    if P_pad != P:                     # padded columns have mask == 0 -> holes
        imgp_t = jnp.pad(imgp_t, ((0, 0), (0, P_pad - P)))
        maskp_t = jnp.pad(maskp_t, ((0, 0), (0, P_pad - P)))

    imgp_t = imgp_t.astype(jnp.float32)
    maskp_t = maskp_t.astype(jnp.float32)
    w2t = weight.reshape(Cout, K).astype(jnp.float32)              # [Cout, K]
    scale = float(kk * Cin)                                        # slide winsize

    cparams = pltpu.CompilerParams(
        dimension_semantics=("parallel",),
        vmem_limit_bytes=int(min(vmem_bytes // 2, 96 * 1024 * 1024)))

    kern1 = functools.partial(_pconv_stats_kernel, cin=Cin, scale=scale)
    out_t, nmask_t, stats = pl.pallas_call(
        kern1,
        out_shape=(jax.ShapeDtypeStruct((Cout, P_pad), jnp.float32),
                   jax.ShapeDtypeStruct((1, P_pad), jnp.float32),
                   jax.ShapeDtypeStruct((num_tiles, Cout, 2), jnp.float32)),
        grid=(num_tiles,),
        in_specs=[pl.BlockSpec((K, tile_p), lambda i: (0, i)),
                  pl.BlockSpec((kk, tile_p), lambda i: (0, i)),
                  pl.BlockSpec((Cout, K), lambda i: (0, 0))],
        out_specs=(pl.BlockSpec((Cout, tile_p), lambda i: (0, i)),
                   pl.BlockSpec((1, tile_p), lambda i: (0, i)),
                   pl.BlockSpec((1, Cout, 2), lambda i: (i, 0, 0))),
        compiler_params=cparams,
        cost_estimate=pl.CostEstimate(
            flops=2 * P_pad * K * Cout,
            transcendentals=P_pad,
            bytes_accessed=4 * (P_pad * (K + kk + Cout + 1)
                                + Cout * K + num_tiles * Cout * 2)),
    )(imgp_t, maskp_t, w2t)

    # Global (training-mode) BatchNorm statistics from the per-tile partials.
    # Padded tail columns are holes (out == 0) and contribute exactly zero.
    s1 = jnp.sum(stats[:, :, 0], axis=0)
    s2 = jnp.sum(stats[:, :, 1], axis=0)
    mean = s1 / P
    var = jnp.maximum(s2 / P - mean * mean, 0.0)       # biased variance, >= 0
    inv_std = lax.rsqrt(var + 1e-5)
    bn_scale = (gamma * inv_std).reshape(Cout, 1).astype(jnp.float32)
    bn_shift = (beta - mean * gamma * inv_std).reshape(Cout, 1).astype(jnp.float32)
    # TODO(synk): BatchNorm running_mean/running_var updates are training-state
    # side effects with no influence on this forward output; not materialized.

    y_t = pl.pallas_call(
        _bn_relu_kernel,
        out_shape=jax.ShapeDtypeStruct((Cout, P_pad), jnp.float32),
        grid=(num_tiles,),
        in_specs=[pl.BlockSpec((Cout, tile_p), lambda i: (0, i)),
                  pl.BlockSpec((Cout, 1), lambda i: (0, 0)),
                  pl.BlockSpec((Cout, 1), lambda i: (0, 0))],
        out_specs=pl.BlockSpec((Cout, tile_p), lambda i: (0, i)),
        compiler_params=cparams,
    )(out_t, bn_scale, bn_shift)

    out = y_t[:, :P].reshape(Cout, N, OH, OW).transpose(1, 0, 2, 3)
    new_mask = nmask_t[:, :P].reshape(1, N, OH, OW).transpose(1, 0, 2, 3)
    new_mask = jnp.broadcast_to(new_mask, (N, Cout, OH, OW))
    return out, new_mask


# ---------------------------------------------------------------------------
# Pure-JAX reference mirroring the PyTorch forward
# ---------------------------------------------------------------------------
def _reference(img, mask, weight, gamma, beta, k, stride, pad):
    dn = lax.conv_dimension_numbers(img.shape, weight.shape,
                                    ('NCHW', 'OIHW', 'NCHW'))
    conv = lax.conv_general_dilated(img * mask, weight, (stride, stride),
                                    [(pad, pad), (pad, pad)],
                                    dimension_numbers=dn)
    mconv = lax.conv_general_dilated(mask, jnp.ones_like(weight),
                                     (stride, stride),
                                     [(pad, pad), (pad, pad)],
                                     dimension_numbers=dn)
    hole = mconv == 0.0
    mask_sum = jnp.where(hole, 1.0, mconv)
    out = conv / mask_sum * (k * k * img.shape[1])
    out = jnp.where(hole, 0.0, out)
    new_mask = jnp.where(hole, 0.0, jnp.ones_like(out))
    mean = out.mean(axis=(0, 2, 3), keepdims=True)
    var = ((out - mean) ** 2).mean(axis=(0, 2, 3), keepdims=True)
    y = (out - mean) / jnp.sqrt(var + 1e-5) * gamma.reshape(1, -1, 1, 1) \
        + beta.reshape(1, -1, 1, 1)
    y = jnp.maximum(y, 0.0)
    return y, new_mask


if __name__ == "__main__":
    # PConvBNActiv(in_channels=4, out_channels=8, sample='none-3', activ='relu',
    #              bn=True, bias=False)
    N, Cin, H, W = 2, 4, 16, 16
    Cout, k, stride, pad = 8, 3, 1, 1

    key = jax.random.PRNGKey(0)
    k_img, k_mask, k_w = jax.random.split(key, 3)

    img = jax.random.normal(k_img, (N, Cin, H, W), dtype=jnp.float32)
    # Irregular binary hole mask (identical across channels, as in the
    # inpainting pipeline).
    mask_hw = (jax.random.uniform(k_mask, (N, 1, H, W)) > 0.4).astype(jnp.float32)
    mask = jnp.broadcast_to(mask_hw, (N, Cin, H, W))

    # Deterministic kaiming_normal_ (fan_in mode, a=0): std = sqrt(2 / fan_in).
    fan_in = Cin * k * k
    weight = jax.random.normal(k_w, (Cout, Cin, k, k), dtype=jnp.float32) \
        * jnp.sqrt(2.0 / fan_in)
    gamma = jnp.ones((Cout,), dtype=jnp.float32)   # BatchNorm2d default affine
    beta = jnp.zeros((Cout,), dtype=jnp.float32)

    out, new_mask = pconv_bn_activ(img, mask, weight, gamma, beta,
                                   kernel_size=k, stride=stride, padding=pad)
    out = jax.block_until_ready(out)
    new_mask = jax.block_until_ready(new_mask)

    ref_out, ref_mask = _reference(img, mask, weight, gamma, beta, k, stride, pad)
    assert out.shape == (N, Cout, H, W) and new_mask.shape == (N, Cout, H, W)
    # Tolerance accommodates the EUP approximate reciprocal in the kernel.
    assert jnp.allclose(out, ref_out, atol=3e-2, rtol=3e-2), "output mismatch"
    assert jnp.allclose(new_mask, ref_mask, atol=1e-6), "mask mismatch"

    print("KERNEL_OK")
</pallas_src>

<mosaic_0001>
module attributes {stable_mosaic.version = 11 : i64} {
  func.func @_pconv_stats_kernel(%arg0: i32, %arg1: memref<36x512xf32, #tpu.memory_space<vmem>>, %arg2: memref<9x512xf32, #tpu.memory_space<vmem>>, %arg3: memref<8x36xf32, #tpu.memory_space<vmem>>, %arg4: memref<8x512xf32, #tpu.memory_space<vmem>>, %arg5: memref<1x512xf32, #tpu.memory_space<vmem>>, %arg6: memref<1x8x2xf32, #tpu.memory_space<vmem>>) attributes {dimension_semantics = [#tpu.dimension_semantics<parallel>], iteration_bounds = array<i64: 1>, scalar_prefetch = 0 : i64, scratch_operands = 0 : i64, tpu.core_type = #tpu.core_type<tc>, window_params = [{transform_indices = @transform_0, window_bounds = array<i64: 36, 512>}, {transform_indices = @transform_1, window_bounds = array<i64: 9, 512>}, {pipeline_mode = #tpu.pipeline_mode<synchronous>, transform_indices = @transform_2, window_bounds = array<i64: 8, 36>}, {transform_indices = @transform_3, window_bounds = array<i64: 8, 512>}, {transform_indices = @transform_4, window_bounds = array<i64: 1, 512>}, {transform_indices = @transform_5, window_bounds = array<i64: 1, 8, 2>}]} {
    %c0 = arith.constant 0 : index
    %c0_0 = arith.constant 0 : index
    %0 = vector.load %arg1[%c0, %c0_0] : memref<36x512xf32, #tpu.memory_space<vmem>>, vector<36x512xf32>
    %c0_1 = arith.constant 0 : index
    %c0_2 = arith.constant 0 : index
    %1 = vector.load %arg2[%c0_1, %c0_2] : memref<9x512xf32, #tpu.memory_space<vmem>>, vector<9x512xf32>
    %2 = tpu.concatenate %1, %1, %1, %1 in 0 : vector<9x512xf32>, vector<9x512xf32>, vector<9x512xf32>, vector<9x512xf32> -> vector<36x512xf32>
    %3 = arith.mulf %0, %2 : vector<36x512xf32>
    %c0_3 = arith.constant 0 : index
    %c0_4 = arith.constant 0 : index
    %4 = vector.load %arg3[%c0_3, %c0_4] : memref<8x36xf32, #tpu.memory_space<vmem>>, vector<8x36xf32>
    %cst = arith.constant dense<0.000000e+00> : vector<8x512xf32>
    %5 = tpu.matmul %4, %3, %cst {dimension_numbers = #tpu.dot_dimension_numbers<[1], [0], [0], [1], [0, 0, 1, 1], [], []>} : vector<8x36xf32>, vector<36x512xf32>, vector<8x512xf32> -> vector<8x512xf32>
    %cst_5 = arith.constant dense<0.000000e+00> : vector<512xf32>
    %6 = vector.multi_reduction <add>, %1, %cst_5 [0] : vector<9x512xf32> to vector<512xf32>
    %7 = vector.shape_cast %6 : vector<512xf32> to vector<1x512xf32>
    %cst_6 = arith.constant 4.000000e+00 : f32
    %8 = vector.broadcast %cst_6 : f32 to vector<1x512xf32>
    %9 = arith.mulf %7, %8 : vector<1x512xf32>
    %cst_7 = arith.constant 0.000000e+00 : f32
    %10 = vector.broadcast %cst_7 : f32 to vector<1x512xf32>
    %11 = arith.cmpf oeq, %9, %10 : vector<1x512xf32>
    %cst_8 = arith.constant 1.000000e+00 : f32
    %12 = vector.broadcast %cst_8 : f32 to vector<1x512xf32>
    %13 = arith.select %11, %12, %9 : vector<1x512xi1>, vector<1x512xf32>
    %14 = tpu.reciprocal %13 {approx = true} : vector<1x512xf32> -> vector<1x512xf32>
    %cst_9 = arith.constant 3.600000e+01 : f32
    %15 = vector.broadcast %cst_9 : f32 to vector<1x512xf32>
    %16 = arith.mulf %14, %15 : vector<1x512xf32>
    %17 = vector.broadcast %16 : vector<1x512xf32> to vector<8x512xf32>
    %18 = arith.mulf %5, %17 : vector<8x512xf32>
    %cst_10 = arith.constant 0.000000e+00 : f32
    %19 = vector.shape_cast %11 : vector<1x512xi1> to vector<1x512xi1>
    %20 = vector.broadcast %19 : vector<1x512xi1> to vector<8x512xi1>
    %21 = vector.broadcast %cst_10 : f32 to vector<8x512xf32>
    %22 = arith.select %20, %21, %18 : vector<8x512xi1>, vector<8x512xf32>
    %c0_11 = arith.constant 0 : index
    %c0_12 = arith.constant 0 : index
    %23 = vector.load %arg4[%c0_11, %c0_12] : memref<8x512xf32, #tpu.memory_space<vmem>>, vector<8x512xf32>
    tpu.vector_store %arg4[%c0_11, %c0_12], %22 {strides = array<i32>} : memref<8x512xf32, #tpu.memory_space<vmem>>, vector<8x512xf32>,
    %cst_13 = arith.constant 0.000000e+00 : f32
    %cst_14 = arith.constant 1.000000e+00 : f32
    %24 = vector.broadcast %cst_13 : f32 to vector<1x512xf32>
    %25 = vector.broadcast %cst_14 : f32 to vector<1x512xf32>
    %26 = arith.select %11, %24, %25 : vector<1x512xi1>, vector<1x512xf32>
    %c0_15 = arith.constant 0 : index
    %c0_16 = arith.constant 0 : index
    %27 = vector.load %arg5[%c0_15, %c0_16] : memref<1x512xf32, #tpu.memory_space<vmem>>, vector<1x512xf32>
    tpu.vector_store %arg5[%c0_15, %c0_16], %26 {strides = array<i32>} : memref<1x512xf32, #tpu.memory_space<vmem>>, vector<1x512xf32>,
    %cst_17 = arith.constant dense<0.000000e+00> : vector<8xf32>
    %28 = vector.multi_reduction <add>, %22, %cst_17 [1] : vector<8x512xf32> to vector<8xf32>
    %29 = vector.shape_cast %28 : vector<8xf32> to vector<8x1xf32>
    %30 = arith.mulf %22, %22 : vector<8x512xf32>
    %cst_18 = arith.constant dense<0.000000e+00> : vector<8xf32>
    %31 = vector.multi_reduction <add>, %30, %cst_18 [1] : vector<8x512xf32> to vector<8xf32>
    %32 = vector.shape_cast %31 : vector<8xf32> to vector<8x1xf32>
    %33 = tpu.concatenate %29, %32 in 1 : vector<8x1xf32>, vector<8x1xf32> -> vector<8x2xf32>
    %34 = vector.shape_cast %33 : vector<8x2xf32> to vector<1x8x2xf32>
    %c0_19 = arith.constant 0 : index
    %c0_20 = arith.constant 0 : index
    %c0_21 = arith.constant 0 : index
    %35 = vector.load %arg6[%c0_19, %c0_20, %c0_21] : memref<1x8x2xf32, #tpu.memory_space<vmem>>, vector<1x8x2xf32>
    tpu.vector_store %arg6[%c0_19, %c0_20, %c0_21], %34 {strides = array<i32>} : memref<1x8x2xf32, #tpu.memory_space<vmem>>, vector<1x8x2xf32>,
    return
  }
  func.func @transform_0(%arg0: i32) -> (i32, i32) {
    %c0_i32 = arith.constant 0 : i32
    %c0_i32_0 = arith.constant 0 : i32
    return %c0_i32, %arg0 : i32, i32
  }
  func.func @transform_1(%arg0: i32) -> (i32, i32) {
    %c0_i32 = arith.constant 0 : i32
    %c0_i32_0 = arith.constant 0 : i32
    return %c0_i32, %arg0 : i32, i32
  }
  func.func @transform_2(%arg0: i32) -> (i32, i32) {
    %c0_i32 = arith.constant 0 : i32
    %c0_i32_0 = arith.constant 0 : i32
    %c0_i32_1 = arith.constant 0 : i32
    return %c0_i32, %c0_i32_0 : i32, i32
  }
  func.func @transform_3(%arg0: i32) -> (i32, i32) {
    %c0_i32 = arith.constant 0 : i32
    %c0_i32_0 = arith.constant 0 : i32
    return %c0_i32, %arg0 : i32, i32
  }
  func.func @transform_4(%arg0: i32) -> (i32, i32) {
    %c0_i32 = arith.constant 0 : i32
    %c0_i32_0 = arith.constant 0 : i32
    return %c0_i32, %arg0 : i32, i32
  }
  func.func @transform_5(%arg0: i32) -> (i32, i32, i32) {
    %c0_i32 = arith.constant 0 : i32
    %c0_i32_0 = arith.constant 0 : i32
    %c0_i32_1 = arith.constant 0 : i32
    return %arg0, %c0_i32, %c0_i32_0 : i32, i32, i32
  }
}

</mosaic_0001>

<llo_original>
// kernel: tpu_custom_call.1
$region0: #{tpu_custom_call.1}
  #allocation0 [shape = 'u32[]', space=smem, size = 0x4, offset = 0x4, fixed_abs, tag = 'smem constant byte address 0x4 - core index']
  #allocation1 [shape = 'u32[144,128]{1,0:T(1,128)}', space=vmem, size = 0x12000, scoped, tag = 'internal scratch']
  %s0 = inlined_call_operand.hbm [shape: f32[36,512], index: 0, kind: input, shape index: {}]
  %s1 = inlined_call_operand.hbm [shape: f32[9,512], index: 1, kind: input, shape index: {}]
  %s2 = inlined_call_operand.hbm [shape: f32[8,36], index: 2, kind: input, shape index: {}]
  %s3 = inlined_call_operand.hbm [shape: f32[8,512], index: 3, kind: output, shape index: {0}]
  %s4 = inlined_call_operand.hbm [shape: f32[1,512], index: 4, kind: output, shape index: {1}]
  %s5 = inlined_call_operand.vmem [shape: f32[1,8,2], index: 5, kind: output, shape index: {2}]
  %6 = xla_tuple %s3, %s4, %s5
  %s7 = sld [smem:[#allocation0]]
  $region50: #{tpu_custom_call.1} parent=0
    _
  %s9 = ssub.s32 1, %s7
  %s10 = scalar_select 0, %s9, %s7
  $region1: #{tpu_custom_call.1} parent=0
    #allocation2 [shape = 'u8[81920]{0}', space=vmem, size = 0x14000, scoped, tag = 'input window, operand 0, single buffered']
    #allocation3 [shape = 's32[1]{0}', space=sflag, size = 0x4, scoped, tag = 'scoped memory for tpu_custom_call.1']
    #allocation4 [shape = 's32[1]{0}', space=sflag, size = 0x4, scoped, tag = 'scoped memory for tpu_custom_call.1']
    #allocation5 [shape = 'u8[32768]{0}', space=vmem, size = 0x8000, scoped, tag = 'input window, operand 1, single buffered']
    #allocation6 [shape = 's32[1]{0}', space=sflag, size = 0x4, scoped, tag = 'scoped memory for tpu_custom_call.1']
    #allocation7 [shape = 'u8[4096]{0}', space=vmem, size = 0x1000, scoped, tag = 'input window, operand 2, single buffered']
    #allocation8 [shape = 'u8[16384]{0}', space=vmem, size = 0x4000, scoped, tag = 'output window, operand 0, single buffered']
    #allocation9 [shape = 'u8[2048]{0}', space=vmem, size = 0x800, scoped, tag = 'output window, operand 1, single buffered']
    #allocation10 [shape = 's32[1]{0}', space=sflag, size = 0x4, scoped, tag = 'scoped memory for tpu_custom_call.1']
    %11 = vsyncpa [#allocation3], 0
    %12 = vsyncpa [#allocation6], 0
    %13 = vsyncpa [#allocation4], 0
    %14 = vsyncpa [#allocation10], 0
    // Predicated region
    $region2: #{tpu_custom_call.1} parent=1 // pred_check
      _
    $region3: #{tpu_custom_call.1} parent=1 // pred_check_branch
      %16 = sbr.rel (0) target = $region5
    $region4: #{tpu_custom_call.1} parent=1 // pred_region
      %s18 = ssub.s32 2560, 2560
      %19 = vsyncadd [#allocation3], %s18
      %s20 = sshll.u32 [#allocation2], 4
      %s21 = int_to_ptr.vmem [resolvable:$true] %s20
      %26 = dma.hbm_to_vmem [thread:$0]  %s0, 2560, %s21, [#allocation3], 512, 512, 32
    $region5: #{tpu_custom_call.1} parent=1 // pred_fallthru
      _
    // Predicated region
    $region6: #{tpu_custom_call.1} parent=1 // pred_check
      _
    $region7: #{tpu_custom_call.1} parent=1 // pred_check_branch
      %28 = sbr.rel (0) target = $region9
    $region8: #{tpu_custom_call.1} parent=1 // pred_region
      %s30 = ssub.s32 1024, 1024
      %31 = vsyncadd [#allocation6], %s30
      %s32 = sshll.u32 [#allocation5], 4
      %s33 = int_to_ptr.vmem [resolvable:$true] %s32
      %38 = dma.hbm_to_vmem [thread:$0]  %s1, 1024, %s33, [#allocation6], 512, 512, 32
    $region9: #{tpu_custom_call.1} parent=1 // pred_fallthru
      _
    // Predicated region
    $region10: #{tpu_custom_call.1} parent=1 // pred_check
      _
    $region11: #{tpu_custom_call.1} parent=1 // pred_check_branch
      %40 = sbr.rel (0) target = $region13
    $region12: #{tpu_custom_call.1} parent=1 // pred_region
      %s42 = ssub.s32 128, 128
      %43 = vsyncadd [#allocation6], %s42
      %s45 = sshll.u32 [#allocation7], 4
      %s46 = int_to_ptr.vmem [resolvable:$true] %s45
      %48 = dma.hbm_to_vmem [thread:$0]  %s2, 128, %s46, [#allocation6]
    $region13: #{tpu_custom_call.1} parent=1 // pred_fallthru
      _
    // Predicated region
    $region14: #{tpu_custom_call.1} parent=1 // pred_check
      _
    $region15: #{tpu_custom_call.1} parent=1 // pred_check_branch
      %50 = sbr.rel (0) target = $region17
    $region16: #{tpu_custom_call.1} parent=1 // pred_region
      %51 = dma.done [#allocation3], 2560
    $region17: #{tpu_custom_call.1} parent=1 // pred_fallthru
      _
    // Predicated region
    $region18: #{tpu_custom_call.1} parent=1 // pred_check
      _
    $region19: #{tpu_custom_call.1} parent=1 // pred_check_branch
      %53 = sbr.rel (0) target = $region21
    $region20: #{tpu_custom_call.1} parent=1 // pred_region
      %54 = dma.done [#allocation6], 1024
    $region21: #{tpu_custom_call.1} parent=1 // pred_fallthru
      _
    // Predicated region
    $region22: #{tpu_custom_call.1} parent=1 // pred_check
      _
    $region23: #{tpu_custom_call.1} parent=1 // pred_check_branch
      %56 = sbr.rel (0) target = $region25
    $region24: #{tpu_custom_call.1} parent=1 // pred_region
      %57 = dma.done [#allocation6], 128
    $region25: #{tpu_custom_call.1} parent=1 // pred_fallthru
      _
    %v58 = vld [vmem:[#allocation2] sm:$0xff]
    %v59 = vld [vmem:[#allocation2 + $0x8] sm:$0xff]
    %v60 = vld [vmem:[#allocation2 + $0x10] sm:$0xff]
    %v61 = vld [vmem:[#allocation2 + $0x18] sm:$0xff]
    %v62 = vld [vmem:[#allocation2 + $0x20] sm:$0xff]
    %v63 = vld [vmem:[#allocation2 + $0x28] sm:$0xff]
    %v64 = vld [vmem:[#allocation2 + $0x30] sm:$0xff]
    %v65 = vld [vmem:[#allocation2 + $0x38] sm:$0xff]
    %v66 = vld [vmem:[#allocation2 + $0x40] sm:$0xff]
    %v67 = vld [vmem:[#allocation2 + $0x48] sm:$0xff]
    %v68 = vld [vmem:[#allocation2 + $0x50] sm:$0xff]
    %v69 = vld [vmem:[#allocation2 + $0x58] sm:$0xff]
    %v70 = vld [vmem:[#allocation2 + $0x60] sm:$0xff]
    %v71 = vld [vmem:[#allocation2 + $0x68] sm:$0xff]
    %v72 = vld [vmem:[#allocation2 + $0x70] sm:$0xff]
    %v73 = vld [vmem:[#allocation2 + $0x78] sm:$0xff]
    %v74 = vld [vmem:[#allocation2 + $0x80] sm:$0xf]
    %v75 = vld [vmem:[#allocation2 + $0x88] sm:$0xf]
    %v76 = vld [vmem:[#allocation2 + $0x90] sm:$0xf]
    %v77 = vld [vmem:[#allocation2 + $0x98] sm:$0xf]
    %v78 = vld [vmem:[#allocation5] sm:$0xff]
    %v79 = vld [vmem:[#allocation5 + $0x8] sm:$0xff]
    %v80 = vld [vmem:[#allocation5 + $0x10] sm:$0xff]
    %v81 = vld [vmem:[#allocation5 + $0x18] sm:$0xff]
    %v82 = vld [vmem:[#allocation5 + $0x20] sm:$0x1]
    %v83 = vld [vmem:[#allocation5 + $0x28] sm:$0x1]
    %v84 = vld [vmem:[#allocation5 + $0x30] sm:$0x1]
    %v85 = vld [vmem:[#allocation5 + $0x38] sm:$0x1]
    %vm94 = vcmask 1040384
    %v95 = vrot.slane %v78, 7
    %v96 = vrot.slane %v79, 7
    %v97 = vrot.slane %v80, 7
    %v98 = vrot.slane %v81, 7
    %v99 = vrot.slane %v82, 7
    %v100 = vsel %vm94, %v95, %v99
    %v101 = vrot.slane %v83, 7
    %v102 = vsel %vm94, %v96, %v101
    %v103 = vrot.slane %v84, 7
    %v104 = vsel %vm94, %v97, %v103
    %v105 = vrot.slane %v85, 7
    %v106 = vsel %vm94, %v98, %v105
    %vm115 = vcmask 1041408
    %v116 = vrot.slane %v78, 6
    %v117 = vrot.slane %v79, 6
    %v118 = vrot.slane %v80, 6
    %v119 = vrot.slane %v81, 6
    %v120 = vrot.slane %v82, 6
    %v121 = vsel %vm115, %v116, %v120
    %v122 = vrot.slane %v83, 6
    %v123 = vsel %vm115, %v117, %v122
    %v124 = vrot.slane %v84, 6
    %v125 = vsel %vm115, %v118, %v124
    %v126 = vrot.slane %v85, 6
    %v127 = vsel %vm115, %v119, %v126
    %vm136 = vcmask 1042432
    %v137 = vrot.slane %v78, 5
    %v138 = vrot.slane %v79, 5
    %v139 = vrot.slane %v80, 5
    %v140 = vrot.slane %v81, 5
    %v141 = vrot.slane %v82, 5
    %v142 = vsel %vm136, %v137, %v141
    %v143 = vrot.slane %v83, 5
    %v144 = vsel %vm136, %v138, %v143
    %v145 = vrot.slane %v84, 5
    %v146 = vsel %vm136, %v139, %v145
    %v147 = vrot.slane %v85, 5
    %v148 = vsel %vm136, %v140, %v147
    %v157 = vsel %vm94, %v82, %v95
    %v158 = vsel %vm94, %v83, %v96
    %v159 = vsel %vm94, %v84, %v97
    %v160 = vsel %vm94, %v85, %v98
    %v161 = vsel %vm115, %v100, %v116
    %v162 = vsel %vm115, %v102, %v117
    %v163 = vsel %vm115, %v104, %v118
    %v164 = vsel %vm115, %v106, %v119
    %v165 = vsel %vm136, %v121, %v137
    %v166 = vsel %vm136, %v123, %v138
    %v167 = vsel %vm136, %v125, %v139
    %v168 = vsel %vm136, %v127, %v140
    %v169 = vmul.f32 %v58, %v78
    %v170 = vmul.f32 %v59, %v79
    %v171 = vmul.f32 %v60, %v80
    %v172 = vmul.f32 %v61, %v81
    %v173 = vmul.f32 %v62, %v157
    %v174 = vmul.f32 %v63, %v158
    %v175 = vmul.f32 %v64, %v159
    %v176 = vmul.f32 %v65, %v160
    %v177 = vmul.f32 %v66, %v161
    %v178 = vmul.f32 %v67, %v162
    %v179 = vmul.f32 %v68, %v163
    %v180 = vmul.f32 %v69, %v164
    %v181 = vmul.f32 %v70, %v165
    %v182 = vmul.f32 %v71, %v166
    %v183 = vmul.f32 %v72, %v167
    %v184 = vmul.f32 %v73, %v168
    %v185 = vmul.f32 %v74, %v142
    %v186 = vmul.f32 %v75, %v144
    %v187 = vmul.f32 %v76, %v146
    %v188 = vmul.f32 %v77, %v148
    %v189 = vld [vmem:[#allocation7] sm:$0xff]
    %vm190 = vcmask 293888
    %v192 = vsel %vm190, %v189, 0
    %vm194 = vcmask 1043456
    %v196 = vsel %vm194, %v185, 0
    %v199 = vsel %vm194, %v186, 0
    %v202 = vsel %vm194, %v187, 0
    %v205 = vsel %vm194, %v188, 0
    %207 = vmatprep.subr.mxu0 %v170
    %208 = vmatpush1.msra.mxu0 %v169
    %209 = vmatprep.subr.mxu0 %v174
    %210 = vmatpush1.msra.mxu0 %v173
    %211 = vmatprep.subr.mxu0 %v178
    %212 = vmatpush1.msra.mxu0 %v177
    %213 = vmatprep.subr.mxu0 %v182
    %214 = vmatpush1.msra.mxu0 %v181
    %215 = vmatprep.subr.mxu0 %v199
    %216 = vmatpush1.msra.mxu0 %v196
    %217 = vmatprep.subr.mxu0 0.0
    %218 = vmatpush1.msra.mxu0 0.0
    %219 = vmatprep.subr.mxu0 0.0
    %220 = vmatpush1.msra.mxu0 0.0
    %221 = vmatprep.subr.mxu0 0.0
    %222 = vmatpush1.msra.mxu0 0.0
    %223 = vmatprep.subr.mxu0 0.0
    %224 = vmatpush1.msra.mxu0 0.0
    %225 = vmatprep.subr.mxu0 0.0
    %226 = vmatpush1.msra.mxu0 0.0
    %227 = vmatprep.subr.mxu0 0.0
    %228 = vmatpush1.msra.mxu0 0.0
    %229 = vmatprep.subr.mxu0 0.0
    %230 = vmatpush1.msra.mxu0 0.0
    %231 = vmatprep.subr.mxu0 0.0
    %232 = vmatpush1.msra.mxu0 0.0
    %233 = vmatprep.subr.mxu0 0.0
    %234 = vmatpush1.msra.mxu0 0.0
    %235 = vmatprep.subr.mxu0 0.0
    %236 = vmatpush1.msra.mxu0 0.0
    %237 = vmatprep.subr.mxu0 0.0
    %238 = vmatpush1.msra.mxu0 0.0
    %239 = vmatprep.subr.mxu0 0.0
    %240 = vmatpush1.msra.mxu0 0.0
    %241 = vmatprep.subr.mxu0 0.0
    %242 = vmatpush1.msra.mxu0 0.0
    %243 = vmatprep.subr.mxu0 0.0
    %244 = vmatpush1.msra.mxu0 0.0
    %245 = vmatprep.subr.mxu0 0.0
    %246 = vmatpush1.msra.mxu0 0.0
    %247 = vmatprep.subr.mxu0 0.0
    %248 = vmatpush1.msra.mxu0 0.0
    %249 = vmatprep.subr.mxu0 0.0
    %250 = vmatpush1.msra.mxu0 0.0
    %251 = vmatprep.subr.mxu0 0.0
    %252 = vmatpush1.msra.mxu0 0.0
    %253 = vmatprep.subr.mxu0 0.0
    %254 = vmatpush1.msra.mxu0 0.0
    %255 = vmatprep.subr.mxu0 0.0
    %256 = vmatpush1.msra.mxu0 0.0
    %257 = vmatprep.subr.mxu0 0.0
    %258 = vmatpush1.msra.mxu0 0.0
    %259 = vmatprep.subr.mxu0 0.0
    %260 = vmatpush1.msra.mxu0 0.0
    %261 = vmatprep.subr.mxu0 0.0
    %262 = vmatpush1.msra.mxu0 0.0
    %263 = vmatprep.subr.mxu0 0.0
    %264 = vmatpush1.msra.mxu0 0.0
    %265 = vmatprep.subr.mxu0 0.0
    %266 = vmatpush1.msra.mxu0 0.0
    %267 = vmatprep.subr.mxu0 0.0
    %268 = vmatpush1.msra.mxu0 0.0
    %269 = vmatprep.subr.mxu0 0.0
    %270 = vmatpush1.msra.mxu0 0.0
    %271 = vmatprep.mubr.f32.mxu0 0.0
    %272 = vmatmul.mubr.f32.gmra.mrb[0].mxu0 %v192
    %v273 = vpop.f32.mrb[0].mxu0
    %v274 = vadd.f32 0.0, %v273
    %v275 = vpop.f32.mrb[0].mxu0
    %v276 = vadd.f32 0.0, %v275
    %277 = vdwg.mxu0
    %278 = vmatprep.subr.mxu0 %v172
    %279 = vmatpush1.msra.mxu0 %v171
    %280 = vmatprep.subr.mxu0 %v176
    %281 = vmatpush1.msra.mxu0 %v175
    %282 = vmatprep.subr.mxu0 %v180
    %283 = vmatpush1.msra.mxu0 %v179
    %284 = vmatprep.subr.mxu0 %v184
    %285 = vmatpush1.msra.mxu0 %v183
    %286 = vmatprep.subr.mxu0 %v205
    %287 = vmatpush1.msra.mxu0 %v202
    %288 = vmatprep.subr.mxu0 0.0
    %289 = vmatpush1.msra.mxu0 0.0
    %290 = vmatprep.subr.mxu0 0.0
    %291 = vmatpush1.msra.mxu0 0.0
    %292 = vmatprep.subr.mxu0 0.0
    %293 = vmatpush1.msra.mxu0 0.0
    %294 = vmatprep.subr.mxu0 0.0
    %295 = vmatpush1.msra.mxu0 0.0
    %296 = vmatprep.subr.mxu0 0.0
    %297 = vmatpush1.msra.mxu0 0.0
    %298 = vmatprep.subr.mxu0 0.0
    %299 = vmatpush1.msra.mxu0 0.0
    %300 = vmatprep.subr.mxu0 0.0
    %301 = vmatpush1.msra.mxu0 0.0
    %302 = vmatprep.subr.mxu0 0.0
    %303 = vmatpush1.msra.mxu0 0.0
    %304 = vmatprep.subr.mxu0 0.0
    %305 = vmatpush1.msra.mxu0 0.0
    %306 = vmatprep.subr.mxu0 0.0
    %307 = vmatpush1.msra.mxu0 0.0
    %308 = vmatprep.subr.mxu0 0.0
    %309 = vmatpush1.msra.mxu0 0.0
    %310 = vmatprep.subr.mxu0 0.0
    %311 = vmatpush1.msra.mxu0 0.0
    %312 = vmatprep.subr.mxu0 0.0
    %313 = vmatpush1.msra.mxu0 0.0
    %314 = vmatprep.subr.mxu0 0.0
    %315 = vmatpush1.msra.mxu0 0.0
    %316 = vmatprep.subr.mxu0 0.0
    %317 = vmatpush1.msra.mxu0 0.0
    %318 = vmatprep.subr.mxu0 0.0
    %319 = vmatpush1.msra.mxu0 0.0
    %320 = vmatprep.subr.mxu0 0.0
    %321 = vmatpush1.msra.mxu0 0.0
    %322 = vmatprep.subr.mxu0 0.0
    %323 = vmatpush1.msra.mxu0 0.0
    %324 = vmatprep.subr.mxu0 0.0
    %325 = vmatpush1.msra.mxu0 0.0
    %326 = vmatprep.subr.mxu0 0.0
    %327 = vmatpush1.msra.mxu0 0.0
    %328 = vmatprep.subr.mxu0 0.0
    %329 = vmatpush1.msra.mxu0 0.0
    %330 = vmatprep.subr.mxu0 0.0
    %331 = vmatpush1.msra.mxu0 0.0
    %332 = vmatprep.subr.mxu0 0.0
    %333 = vmatpush1.msra.mxu0 0.0
    %334 = vmatprep.subr.mxu0 0.0
    %335 = vmatpush1.msra.mxu0 0.0
    %336 = vmatprep.subr.mxu0 0.0
    %337 = vmatpush1.msra.mxu0 0.0
    %338 = vmatprep.subr.mxu0 0.0
    %339 = vmatpush1.msra.mxu0 0.0
    %340 = vmatprep.subr.mxu0 0.0
    %341 = vmatpush1.msra.mxu0 0.0
    %342 = vmatprep.mubr.f32.mxu0 0.0
    %343 = vmatmul.mubr.f32.gmra.mrb[0].mxu0 %v192
    %v344 = vpop.f32.mrb[0].mxu0
    %v345 = vadd.f32 0.0, %v344
    %v346 = vpop.f32.mrb[0].mxu0
    %v347 = vadd.f32 0.0, %v346
    %348 = vdwg.mxu0
    %v349 = vsel %vm94, %v82, 0.0
    %v350 = vadd.f32 %v78, %v349
    %v351 = vrot.slane %v350, 4
    %v352 = vadd.f32 %v350, %v351
    %v353 = vrot.slane %v352, 2
    %v354 = vadd.f32 %v352, %v353
    %v355 = vrot.slane %v354, 1
    %v356 = vadd.f32 %v354, %v355
    %v357 = vsel %vm94, %v83, 0.0
    %v358 = vadd.f32 %v79, %v357
    %v359 = vrot.slane %v358, 4
    %v360 = vadd.f32 %v358, %v359
    %v361 = vrot.slane %v360, 2
    %v362 = vadd.f32 %v360, %v361
    %v363 = vrot.slane %v362, 1
    %v364 = vadd.f32 %v362, %v363
    %v365 = vsel %vm94, %v84, 0.0
    %v366 = vadd.f32 %v80, %v365
    %v367 = vrot.slane %v366, 4
    %v368 = vadd.f32 %v366, %v367
    %v369 = vrot.slane %v368, 2
    %v370 = vadd.f32 %v368, %v369
    %v371 = vrot.slane %v370, 1
    %v372 = vadd.f32 %v370, %v371
    %v373 = vsel %vm94, %v85, 0.0
    %v374 = vadd.f32 %v81, %v373
    %v375 = vrot.slane %v374, 4
    %v376 = vadd.f32 %v374, %v375
    %v377 = vrot.slane %v376, 2
    %v378 = vadd.f32 %v376, %v377
    %v379 = vrot.slane %v378, 1
    %v380 = vadd.f32 %v378, %v379
    %v381 = vmul.f32 %v356, 4.0
    %v382 = vmul.f32 %v364, 4.0
    %v383 = vmul.f32 %v372, 4.0
    %v384 = vmul.f32 %v380, 4.0
    %vm385 = vcmp.eq.f32.partialorder %v381, 0.0
    %vm386 = vcmp.eq.f32.partialorder %v382, 0.0
    %vm387 = vcmp.eq.f32.partialorder %v383, 0.0
    %vm388 = vcmp.eq.f32.partialorder %v384, 0.0
    %v389 = vsel %vm385, 1.0, %v381
    %v390 = vsel %vm386, 1.0, %v382
    %v391 = vsel %vm387, 1.0, %v383
    %v392 = vsel %vm388, 1.0, %v384
    %v393 = vrcp.pop %v389
    %v394 = vrcp.pop %v390
    %v395 = vrcp.pop %v391
    %v396 = vrcp.pop %v392
    %v397 = vmul.f32 %v393, 36.0
    %v398 = vmul.f32 %v394, 36.0
    %v399 = vmul.f32 %v395, 36.0
    %v400 = vmul.f32 %v396, 36.0
    %v401 = vmul.f32 %v274, %v397
    %v402 = vmul.f32 %v276, %v398
    %v403 = vmul.f32 %v345, %v399
    %v404 = vmul.f32 %v347, %v400
    %v405 = vsel %vm385, 1, 0
    %v406 = vsel %vm386, 1, 0
    %v407 = vsel %vm387, 1, 0
    %v408 = vsel %vm388, 1, 0
    %vm409 = vcmp.eq.s32.totalorder %v405, 1
    %vm410 = vcmp.eq.s32.totalorder %v406, 1
    %vm411 = vcmp.eq.s32.totalorder %v407, 1
    %vm412 = vcmp.eq.s32.totalorder %v408, 1
    %v413 = vsel %vm409, 0.0, %v401
    %v414 = vsel %vm410, 0.0, %v402
    %v415 = vsel %vm411, 0.0, %v403
    %v416 = vsel %vm412, 0.0, %v404
    %417 = vst [vmem:[#allocation8] sm:$0xff] %v413
    %418 = vst [vmem:[#allocation8 + $0x8] sm:$0xff] %v414
    %419 = vst [vmem:[#allocation8 + $0x10] sm:$0xff] %v415
    %420 = vst [vmem:[#allocation8 + $0x18] sm:$0xff] %v416
    %v421 = vsel %vm385, 0.0, 1.0
    %v422 = vsel %vm386, 0.0, 1.0
    %v423 = vsel %vm387, 0.0, 1.0
    %v424 = vsel %vm388, 0.0, 1.0
    %v429 = vcombine.low %v421, %v422
    %v430 = vcombine.low %v423, %v424
    %v432 = vunpack.c.l.s4 1966171168
    %v433 = vunpack.c.0.s8 %v432
    %v434 = vlaneseq
    %v435 = vshrl.u32 %v434, 7
    %v436 = vsub.s32 %v433, %v435
    %v437 = vrot.slane %v429, %v436
    %v439 = vunpack.c.l.s4 1966171168
    %v440 = vunpack.c.0.s8 %v439
    %v441 = vlaneseq
    %v442 = vshrl.u32 %v441, 7
    %v443 = vsub.s32 %v440, %v442
    %v444 = vrot.slane %v430, %v443
    %v445 = vcombine.low %v437, %v444
    %v447 = vunpack.c.l.s4 1966171168
    %v448 = vunpack.c.0.s8 %v447
    %v449 = vlaneseq
    %v450 = vshrl.u32 %v449, 7
    %v451 = vsub.s32 %v448, %v450
    %v452 = vrot.slane %v445, %v451
    %v454 = vlaneseq
    %vm455 = vcmp.ge.s32.totalorder %v454, 0
    %vm456 = vcmp.lt.s32.totalorder %v454, 512
    %vm457 = vmand %vm455, %vm456
    %458 = vst.msk [vmem:[#allocation9] sm:$0xf] %vm457, %v452
    %v459 = vadd.f32 %v413, %v414
    %v460 = vadd.f32 %v459, %v415
    %v461 = vadd.f32 %v460, %v416
    %462 = vadd.xlane.f32.xlu0 %v461
    %v463 = vpop.xlane.xlu0 %462
    %v464 = vmul.f32 %v413, %v413
    %v465 = vmul.f32 %v414, %v414
    %v466 = vmul.f32 %v415, %v415
    %v467 = vmul.f32 %v416, %v416
    %v468 = vadd.f32 %v464, %v465
    %v469 = vadd.f32 %v468, %v466
    %v470 = vadd.f32 %v469, %v467
    %471 = vadd.xlane.f32.xlu0 %v470
    %v472 = vpop.xlane.xlu0 %471
    %vm473 = vcmask 7168
    %v474 = vsel %vm473, %v463, %v472
    %vm475 = vcmask 15360
    %476 = vst.msk [vmem:[%s5] sm:$0xff] %vm475, %v474
    // Predicated region
    $region26: #{tpu_custom_call.1} parent=1 // pred_check
      _
    $region27: #{tpu_custom_call.1} parent=1 // pred_check_branch
      %478 = sbr.rel (0) target = $region29
    $region28: #{tpu_custom_call.1} parent=1 // pred_region
      %s480 = ssub.s32 512, 512
      %481 = vsyncadd [#allocation4], %s480
      %s483 = sshll.u32 [#allocation8], 4
      %s484 = int_to_ptr.vmem [resolvable:$true] %s483
      %486 = dma.vmem_to_hbm [thread:$0]  %s484, 512, %s3, [#allocation4]
    $region29: #{tpu_custom_call.1} parent=1 // pred_fallthru
      _
    // Predicated region
    $region30: #{tpu_custom_call.1} parent=1 // pred_check
      _
    $region31: #{tpu_custom_call.1} parent=1 // pred_check_branch
      %488 = sbr.rel (0) target = $region33
    $region32: #{tpu_custom_call.1} parent=1 // pred_region
      %s490 = ssub.s32 64, 64
      %491 = vsyncadd [#allocation10], %s490
      %s493 = sshll.u32 [#allocation9], 4
      %s494 = int_to_ptr.vmem [resolvable:$true] %s493
      %496 = dma.vmem_to_hbm [thread:$0]  %s494, 64, %s4, [#allocation10]
    $region33: #{tpu_custom_call.1} parent=1 // pred_fallthru
      _
    // Predicated region
    $region34: #{tpu_custom_call.1} parent=1 // pred_check
      _
    $region35: #{tpu_custom_call.1} parent=1 // pred_check_branch
      %498 = sbr.rel (0) target = $region37
    $region36: #{tpu_custom_call.1} parent=1 // pred_region
      _
    $region37: #{tpu_custom_call.1} parent=1 // pred_fallthru
      _
    // Predicated region
    $region38: #{tpu_custom_call.1} parent=1 // pred_check
      _
    $region39: #{tpu_custom_call.1} parent=1 // pred_check_branch
      %500 = sbr.rel (0) target = $region41
    $region40: #{tpu_custom_call.1} parent=1 // pred_region
      %501 = dma.done [#allocation4], 512
    $region41: #{tpu_custom_call.1} parent=1 // pred_fallthru
      _
    // Predicated region
    $region42: #{tpu_custom_call.1} parent=1 // pred_check
      _
    $region43: #{tpu_custom_call.1} parent=1 // pred_check_branch
      %503 = sbr.rel (0) target = $region45
    $region44: #{tpu_custom_call.1} parent=1 // pred_region
      %504 = dma.done [#allocation10], 64
    $region45: #{tpu_custom_call.1} parent=1 // pred_fallthru
      _
    // Predicated region
    $region46: #{tpu_custom_call.1} parent=1 // pred_check
      _
    $region47: #{tpu_custom_call.1} parent=1 // pred_check_branch
      %506 = sbr.rel (0) target = $region49
    $region48: #{tpu_custom_call.1} parent=1 // pred_region
      _
    $region49: #{tpu_custom_call.1} parent=1 // pred_fallthru
      _
    %507 = vsyncpa [#allocation3], 1
    %508 = vsyncpa [#allocation6], 1
    %509 = vsyncpa [#allocation4], 1
    %510 = vsyncpa [#allocation10], 1

</llo_original>
